<compile_context>
chip_gen: v6e
topology: v6e:2x2x1
jax: 0.10.0
libtpu: 0.0.40
codegen_flags: <defaults>
</compile_context>

<pallas_src>
import jax
import jax.numpy as jnp
from jax.experimental import pallas as pl
from jax.experimental.pallas import tpu as pltpu

K = 15          # number of Zernike modes (fixed by the module's __init__)
_LANE = 128


def _pupil_kernel(c_ref, z_ref, re_ref, im_ref):
    # c_ref : (2K,) f32 in SMEM -- [0:K] = tanh(ampli_coeff), [K:2K] = tanh(phase_coeff)
    # z_ref : (K, tr, c) Zernike tile (f32 or bf16), streamed / multi-buffered VMEM
    # re_ref, im_ref : (tr, c) f32 lane-dense output tiles
    num_modes = z_ref.shape[0]

    # Single fused pass over the Zernike stack: each z slab is read once and
    # feeds BOTH accumulators (scalar-broadcast VPU MACs, f32 accumulation
    # regardless of the basis storage dtype).
    z0 = z_ref[0].astype(jnp.float32)
    ampli = z0 * c_ref[0]
    phase = z0 * c_ref[num_modes]
    for kk in range(1, num_modes):
        z_k = z_ref[kk].astype(jnp.float32)
        ampli = ampli + z_k * c_ref[kk]
        phase = phase + z_k * c_ref[num_modes + kk]

    # pupil = ampli * exp(i * phase)  ->  real / imag planes.
    re_ref[...] = ampli * jnp.cos(phase)
    im_ref[...] = ampli * jnp.sin(phase)


def _round_up(x, m):
    return ((x + m - 1) // m) * m


def _pick_row_tile(r, c, itemsize, k, *, target_steps=8,
                   min_block_bytes=512 << 10, max_block_bytes=4 << 20):
    """Row tile for the (K, r, c) basis stream.

    Must be a multiple of the sublane packing (8 for f32, 16 for bf16) or equal
    to r.  Aims for ~target_steps grid steps (pipelining + v7x megacore) while
    keeping each z block in [~0.5 MiB, ~4 MiB] so the multi-buffer stays far
    below the scoped-VMEM limit on every generation.
    """
    sub = (8 * 4) // itemsize                    # f32 -> 8, bf16 -> 16
    if r <= sub:
        return r
    row_bytes = k * c * itemsize
    tr_steps = _round_up(pl.cdiv(r, target_steps), sub)          # ~target_steps steps
    tr_cap = max(sub, (max_block_bytes // row_bytes) // sub * sub)  # block <= ~4 MiB
    tr_floor = _round_up(pl.cdiv(min_block_bytes, row_bytes), sub)  # block >= ~0.5 MiB
    tr = max(min(tr_steps, tr_cap), min(tr_floor, tr_cap), sub)
    if tr >= r:
        return r
    # Prefer a tile that divides r exactly (no partial last block -> no masked
    # stores and no garbage rows flowing through sin/cos).
    d = tr
    while d >= max(sub, tr // 2):
        if r % d == 0:
            return d
        d -= sub
    return tr


def pupil_estimate_ca_complex(zernike_pupils, ampli_coeff, phase_coeff,
                              *, return_planes=False):
    """zernike_pupils: (K, H, W) float32 or bfloat16 (it is a fixed basis --
    casting it to bf16 ONCE outside this call halves the dominant HBM stream).
    ampli_coeff / phase_coeff: (K, 1, 1) float32 parameters.

    Returns the complex64 (H, W) pupil (module semantics), or the (re, im)
    float32 planes when return_planes=True (skips one full output HBM pass).
    """
    k, h, w = zernike_pupils.shape
    n = h * w
    itemsize = jnp.dtype(zernike_pupils.dtype).itemsize

    # tanh of the 2*K parameters is 30 scalars -> plain JAX, shipped via SMEM.
    coeffs = jnp.concatenate(
        [jnp.tanh(ampli_coeff).reshape(k), jnp.tanh(phase_coeff).reshape(k)]
    ).astype(jnp.float32)                                          # (2K,)

    # ---- lane-dense (r, c) view of the pupil, with NO data copy if possible.
    if w % _LANE == 0:
        r, c = h, w                                  # native (K, H, W) tiling
        z = zernike_pupils
    else:
        c = 0
        d = _LANE
        while d <= min(n, 2048):                     # largest 128-multiple divisor of n
            if n % d == 0:
                c = d
            d += _LANE
        if c:
            r = n // c
            z = zernike_pupils.reshape(k, r, c)      # contiguous view -> free reshape
        else:
            # Rare fallback (H*W not a multiple of 128): one extra HBM pass.
            # TODO(synk): pre-pad the constant Zernike basis once at module init.
            c = min(512, _LANE * pl.cdiv(n, _LANE))
            r = pl.cdiv(n, c)
            z = jnp.pad(zernike_pupils.reshape(k, n),
                        ((0, 0), (0, r * c - n))).reshape(k, r, c)
    n_view = r * c

    tr = _pick_row_tile(r, c, itemsize, k)
    grid_steps = pl.cdiv(r, tr)

    z_spec = pl.BlockSpec((k, tr, c), lambda i: (0, i, 0))
    if grid_steps >= 3:
        # Deeper input buffering hides DMA jitter (largest effect on v5e's HBM).
        z_spec = pl.BlockSpec((k, tr, c), lambda i: (0, i, 0),
                              pipeline_mode=pl.Buffered(3))

    re, im = pl.pallas_call(
        _pupil_kernel,
        out_shape=(
            jax.ShapeDtypeStruct((r, c), jnp.float32),
            jax.ShapeDtypeStruct((r, c), jnp.float32),
        ),
        grid=(grid_steps,),
        in_specs=[
            # 2K tanh'd coefficients as SMEM scalars (whole array, untiled).
            pl.BlockSpec(memory_space=pltpu.MemorySpace.SMEM),
            # Streamed, multi-buffered Zernike tiles.
            z_spec,
        ],
        out_specs=(
            pl.BlockSpec((tr, c), lambda i: (i, 0)),
            pl.BlockSpec((tr, c), lambda i: (i, 0)),
        ),
        compiler_params=pltpu.CompilerParams(
            dimension_semantics=("parallel",),     # v7x: both TCs split the row tiles
            vmem_limit_bytes=32 * 1024 * 1024,     # explicit: v5e scoped default is 16 MiB
        ),
    )(coeffs, z)

    if n_view != n:                                 # only the rare pad fallback
        re = re.reshape(n_view)[:n]
        im = im.reshape(n_view)[:n]
    re = re.reshape(h, w)
    im = im.reshape(h, w)
    if return_planes:
        return re, im
    # Complex64 assembly kept in glue JAX (Pallas TPU has no complex dtype);
    # consumers that can take re/im directly should use return_planes=True.
    return jax.lax.complex(re, im)


def make_params():
    # Deterministic init matching the module: phase_coeff = zeros(15,1,1);
    # ampli_coeff = e0 (1 at mode 0).  (CUDA-path semantics of the original.)
    phase_coeff = jnp.zeros((K, 1, 1), dtype=jnp.float32)
    ampli_coeff = jnp.zeros((K, 1, 1), dtype=jnp.float32).at[0, 0, 0].set(1.0)
    return ampli_coeff, phase_coeff


def reference(zernike_pupils, ampli_coeff, phase_coeff):
    zf = zernike_pupils.astype(jnp.float32)
    ampli = jnp.sum(zf * jnp.tanh(ampli_coeff), axis=0)
    phase = jnp.sum(zf * jnp.tanh(phase_coeff), axis=0)
    return ampli * jnp.exp(1j * phase)


if __name__ == "__main__":
    key = jax.random.PRNGKey(0)
    k_z, k_a, k_p, k_z2 = jax.random.split(key, 4)

    # Module's deterministic init, perturbed slightly so both tanh paths and
    # the trig are actually exercised (still fully deterministic).
    ampli_coeff, phase_coeff = make_params()
    ampli_coeff = ampli_coeff + 0.1 * jax.random.normal(k_a, (K, 1, 1), jnp.float32)
    phase_coeff = phase_coeff + 0.1 * jax.random.normal(k_p, (K, 1, 1), jnp.float32)

    # --- small pupil (module-scale test): flat lane-dense view, single step.
    H = W = 16
    zernike_pupils = jax.random.normal(k_z, (K, H, W), dtype=jnp.float32)
    ref = reference(zernike_pupils, ampli_coeff, phase_coeff)

    pupil = jax.block_until_ready(
        pupil_estimate_ca_complex(zernike_pupils, ampli_coeff, phase_coeff))
    assert pupil.shape == (H, W) and pupil.dtype == jnp.complex64
    assert jnp.allclose(pupil, ref, atol=1e-4, rtol=1e-4)

    # --- same pupil with the constant basis stored as bf16 (cast once, outside
    #     the call): halves the streamed HBM bytes, f32 accumulation in-kernel.
    z_bf16 = zernike_pupils.astype(jnp.bfloat16)
    pupil_bf16 = jax.block_until_ready(
        pupil_estimate_ca_complex(z_bf16, ampli_coeff, phase_coeff))
    assert jnp.allclose(pupil_bf16, ref, atol=5e-2, rtol=5e-2)

    # --- moderate pupil: native (K, H, W) tiling (W % 128 == 0), multi-step
    #     pipelined grid with deeper buffering, no pad / no partial blocks.
    H2 = W2 = 256
    z_big = jax.random.normal(k_z2, (K, H2, W2), dtype=jnp.float32)
    pupil_big = jax.block_until_ready(
        pupil_estimate_ca_complex(z_big, ampli_coeff, phase_coeff))
    ref_big = reference(z_big, ampli_coeff, phase_coeff)
    assert pupil_big.shape == (H2, W2) and pupil_big.dtype == jnp.complex64
    assert jnp.allclose(pupil_big, ref_big, atol=1e-4, rtol=1e-4)

    print("KERNEL_OK")
</pallas_src>

<mosaic_0001>
module attributes {stable_mosaic.version = 11 : i64} {
  func.func @_pupil_kernel(%arg0: i32, %arg1: memref<30xf32, #tpu.memory_space<smem>>, %arg2: memref<15x1x256xf32, #tpu.memory_space<vmem>>, %arg3: memref<1x256xf32, #tpu.memory_space<vmem>>, %arg4: memref<1x256xf32, #tpu.memory_space<vmem>>) attributes {dimension_semantics = [#tpu.dimension_semantics<parallel>], iteration_bounds = array<i64: 1>, scalar_prefetch = 0 : i64, scratch_operands = 0 : i64, tpu.core_type = #tpu.core_type<tc>, window_params = [{transform_indices = @transform_0, window_bounds = array<i64: 30>}, {transform_indices = @transform_1, window_bounds = array<i64: 15, 1, 256>}, {transform_indices = @transform_2, window_bounds = array<i64: 1, 256>}, {transform_indices = @transform_3, window_bounds = array<i64: 1, 256>}]} {
    %c0 = arith.constant 0 : index
    %c0_0 = arith.constant 0 : index
    %c0_1 = arith.constant 0 : index
    %0 = vector.load %arg2[%c0, %c0_0, %c0_1] : memref<15x1x256xf32, #tpu.memory_space<vmem>>, vector<1x1x256xf32>
    %1 = vector.shape_cast %0 : vector<1x1x256xf32> to vector<1x256xf32>
    %c0_2 = arith.constant 0 : index
    %2 = memref.load %arg1[%c0_2] : memref<30xf32, #tpu.memory_space<smem>>
    %3 = vector.broadcast %2 : f32 to vector<1x256xf32>
    %4 = arith.mulf %1, %3 : vector<1x256xf32>
    %c15 = arith.constant 15 : index
    %5 = memref.load %arg1[%c15] : memref<30xf32, #tpu.memory_space<smem>>
    %6 = vector.broadcast %5 : f32 to vector<1x256xf32>
    %7 = arith.mulf %1, %6 : vector<1x256xf32>
    %c1 = arith.constant 1 : index
    %c0_3 = arith.constant 0 : index
    %c0_4 = arith.constant 0 : index
    %8 = vector.load %arg2[%c1, %c0_3, %c0_4] : memref<15x1x256xf32, #tpu.memory_space<vmem>>, vector<1x1x256xf32>
    %9 = vector.shape_cast %8 : vector<1x1x256xf32> to vector<1x256xf32>
    %c1_5 = arith.constant 1 : index
    %10 = memref.load %arg1[%c1_5] : memref<30xf32, #tpu.memory_space<smem>>
    %11 = vector.broadcast %10 : f32 to vector<1x256xf32>
    %12 = arith.mulf %9, %11 : vector<1x256xf32>
    %13 = arith.addf %4, %12 : vector<1x256xf32>
    %c16 = arith.constant 16 : index
    %14 = memref.load %arg1[%c16] : memref<30xf32, #tpu.memory_space<smem>>
    %15 = vector.broadcast %14 : f32 to vector<1x256xf32>
    %16 = arith.mulf %9, %15 : vector<1x256xf32>
    %17 = arith.addf %7, %16 : vector<1x256xf32>
    %c2 = arith.constant 2 : index
    %c0_6 = arith.constant 0 : index
    %c0_7 = arith.constant 0 : index
    %18 = vector.load %arg2[%c2, %c0_6, %c0_7] : memref<15x1x256xf32, #tpu.memory_space<vmem>>, vector<1x1x256xf32>
    %19 = vector.shape_cast %18 : vector<1x1x256xf32> to vector<1x256xf32>
    %c2_8 = arith.constant 2 : index
    %20 = memref.load %arg1[%c2_8] : memref<30xf32, #tpu.memory_space<smem>>
    %21 = vector.broadcast %20 : f32 to vector<1x256xf32>
    %22 = arith.mulf %19, %21 : vector<1x256xf32>
    %23 = arith.addf %13, %22 : vector<1x256xf32>
    %c17 = arith.constant 17 : index
    %24 = memref.load %arg1[%c17] : memref<30xf32, #tpu.memory_space<smem>>
    %25 = vector.broadcast %24 : f32 to vector<1x256xf32>
    %26 = arith.mulf %19, %25 : vector<1x256xf32>
    %27 = arith.addf %17, %26 : vector<1x256xf32>
    %c3 = arith.constant 3 : index
    %c0_9 = arith.constant 0 : index
    %c0_10 = arith.constant 0 : index
    %28 = vector.load %arg2[%c3, %c0_9, %c0_10] : memref<15x1x256xf32, #tpu.memory_space<vmem>>, vector<1x1x256xf32>
    %29 = vector.shape_cast %28 : vector<1x1x256xf32> to vector<1x256xf32>
    %c3_11 = arith.constant 3 : index
    %30 = memref.load %arg1[%c3_11] : memref<30xf32, #tpu.memory_space<smem>>
    %31 = vector.broadcast %30 : f32 to vector<1x256xf32>
    %32 = arith.mulf %29, %31 : vector<1x256xf32>
    %33 = arith.addf %23, %32 : vector<1x256xf32>
    %c18 = arith.constant 18 : index
    %34 = memref.load %arg1[%c18] : memref<30xf32, #tpu.memory_space<smem>>
    %35 = vector.broadcast %34 : f32 to vector<1x256xf32>
    %36 = arith.mulf %29, %35 : vector<1x256xf32>
    %37 = arith.addf %27, %36 : vector<1x256xf32>
    %c4 = arith.constant 4 : index
    %c0_12 = arith.constant 0 : index
    %c0_13 = arith.constant 0 : index
    %38 = vector.load %arg2[%c4, %c0_12, %c0_13] : memref<15x1x256xf32, #tpu.memory_space<vmem>>, vector<1x1x256xf32>
    %39 = vector.shape_cast %38 : vector<1x1x256xf32> to vector<1x256xf32>
    %c4_14 = arith.constant 4 : index
    %40 = memref.load %arg1[%c4_14] : memref<30xf32, #tpu.memory_space<smem>>
    %41 = vector.broadcast %40 : f32 to vector<1x256xf32>
    %42 = arith.mulf %39, %41 : vector<1x256xf32>
    %43 = arith.addf %33, %42 : vector<1x256xf32>
    %c19 = arith.constant 19 : index
    %44 = memref.load %arg1[%c19] : memref<30xf32, #tpu.memory_space<smem>>
    %45 = vector.broadcast %44 : f32 to vector<1x256xf32>
    %46 = arith.mulf %39, %45 : vector<1x256xf32>
    %47 = arith.addf %37, %46 : vector<1x256xf32>
    %c5 = arith.constant 5 : index
    %c0_15 = arith.constant 0 : index
    %c0_16 = arith.constant 0 : index
    %48 = vector.load %arg2[%c5, %c0_15, %c0_16] : memref<15x1x256xf32, #tpu.memory_space<vmem>>, vector<1x1x256xf32>
    %49 = vector.shape_cast %48 : vector<1x1x256xf32> to vector<1x256xf32>
    %c5_17 = arith.constant 5 : index
    %50 = memref.load %arg1[%c5_17] : memref<30xf32, #tpu.memory_space<smem>>
    %51 = vector.broadcast %50 : f32 to vector<1x256xf32>
    %52 = arith.mulf %49, %51 : vector<1x256xf32>
    %53 = arith.addf %43, %52 : vector<1x256xf32>
    %c20 = arith.constant 20 : index
    %54 = memref.load %arg1[%c20] : memref<30xf32, #tpu.memory_space<smem>>
    %55 = vector.broadcast %54 : f32 to vector<1x256xf32>
    %56 = arith.mulf %49, %55 : vector<1x256xf32>
    %57 = arith.addf %47, %56 : vector<1x256xf32>
    %c6 = arith.constant 6 : index
    %c0_18 = arith.constant 0 : index
    %c0_19 = arith.constant 0 : index
    %58 = vector.load %arg2[%c6, %c0_18, %c0_19] : memref<15x1x256xf32, #tpu.memory_space<vmem>>, vector<1x1x256xf32>
    %59 = vector.shape_cast %58 : vector<1x1x256xf32> to vector<1x256xf32>
    %c6_20 = arith.constant 6 : index
    %60 = memref.load %arg1[%c6_20] : memref<30xf32, #tpu.memory_space<smem>>
    %61 = vector.broadcast %60 : f32 to vector<1x256xf32>
    %62 = arith.mulf %59, %61 : vector<1x256xf32>
    %63 = arith.addf %53, %62 : vector<1x256xf32>
    %c21 = arith.constant 21 : index
    %64 = memref.load %arg1[%c21] : memref<30xf32, #tpu.memory_space<smem>>
    %65 = vector.broadcast %64 : f32 to vector<1x256xf32>
    %66 = arith.mulf %59, %65 : vector<1x256xf32>
    %67 = arith.addf %57, %66 : vector<1x256xf32>
    %c7 = arith.constant 7 : index
    %c0_21 = arith.constant 0 : index
    %c0_22 = arith.constant 0 : index
    %68 = vector.load %arg2[%c7, %c0_21, %c0_22] : memref<15x1x256xf32, #tpu.memory_space<vmem>>, vector<1x1x256xf32>
    %69 = vector.shape_cast %68 : vector<1x1x256xf32> to vector<1x256xf32>
    %c7_23 = arith.constant 7 : index
    %70 = memref.load %arg1[%c7_23] : memref<30xf32, #tpu.memory_space<smem>>
    %71 = vector.broadcast %70 : f32 to vector<1x256xf32>
    %72 = arith.mulf %69, %71 : vector<1x256xf32>
    %73 = arith.addf %63, %72 : vector<1x256xf32>
    %c22 = arith.constant 22 : index
    %74 = memref.load %arg1[%c22] : memref<30xf32, #tpu.memory_space<smem>>
    %75 = vector.broadcast %74 : f32 to vector<1x256xf32>
    %76 = arith.mulf %69, %75 : vector<1x256xf32>
    %77 = arith.addf %67, %76 : vector<1x256xf32>
    %c8 = arith.constant 8 : index
    %c0_24 = arith.constant 0 : index
    %c0_25 = arith.constant 0 : index
    %78 = vector.load %arg2[%c8, %c0_24, %c0_25] : memref<15x1x256xf32, #tpu.memory_space<vmem>>, vector<1x1x256xf32>
    %79 = vector.shape_cast %78 : vector<1x1x256xf32> to vector<1x256xf32>
    %c8_26 = arith.constant 8 : index
    %80 = memref.load %arg1[%c8_26] : memref<30xf32, #tpu.memory_space<smem>>
    %81 = vector.broadcast %80 : f32 to vector<1x256xf32>
    %82 = arith.mulf %79, %81 : vector<1x256xf32>
    %83 = arith.addf %73, %82 : vector<1x256xf32>
    %c23 = arith.constant 23 : index
    %84 = memref.load %arg1[%c23] : memref<30xf32, #tpu.memory_space<smem>>
    %85 = vector.broadcast %84 : f32 to vector<1x256xf32>
    %86 = arith.mulf %79, %85 : vector<1x256xf32>
    %87 = arith.addf %77, %86 : vector<1x256xf32>
    %c9 = arith.constant 9 : index
    %c0_27 = arith.constant 0 : index
    %c0_28 = arith.constant 0 : index
    %88 = vector.load %arg2[%c9, %c0_27, %c0_28] : memref<15x1x256xf32, #tpu.memory_space<vmem>>, vector<1x1x256xf32>
    %89 = vector.shape_cast %88 : vector<1x1x256xf32> to vector<1x256xf32>
    %c9_29 = arith.constant 9 : index
    %90 = memref.load %arg1[%c9_29] : memref<30xf32, #tpu.memory_space<smem>>
    %91 = vector.broadcast %90 : f32 to vector<1x256xf32>
    %92 = arith.mulf %89, %91 : vector<1x256xf32>
    %93 = arith.addf %83, %92 : vector<1x256xf32>
    %c24 = arith.constant 24 : index
    %94 = memref.load %arg1[%c24] : memref<30xf32, #tpu.memory_space<smem>>
    %95 = vector.broadcast %94 : f32 to vector<1x256xf32>
    %96 = arith.mulf %89, %95 : vector<1x256xf32>
    %97 = arith.addf %87, %96 : vector<1x256xf32>
    %c10 = arith.constant 10 : index
    %c0_30 = arith.constant 0 : index
    %c0_31 = arith.constant 0 : index
    %98 = vector.load %arg2[%c10, %c0_30, %c0_31] : memref<15x1x256xf32, #tpu.memory_space<vmem>>, vector<1x1x256xf32>
    %99 = vector.shape_cast %98 : vector<1x1x256xf32> to vector<1x256xf32>
    %c10_32 = arith.constant 10 : index
    %100 = memref.load %arg1[%c10_32] : memref<30xf32, #tpu.memory_space<smem>>
    %101 = vector.broadcast %100 : f32 to vector<1x256xf32>
    %102 = arith.mulf %99, %101 : vector<1x256xf32>
    %103 = arith.addf %93, %102 : vector<1x256xf32>
    %c25 = arith.constant 25 : index
    %104 = memref.load %arg1[%c25] : memref<30xf32, #tpu.memory_space<smem>>
    %105 = vector.broadcast %104 : f32 to vector<1x256xf32>
    %106 = arith.mulf %99, %105 : vector<1x256xf32>
    %107 = arith.addf %97, %106 : vector<1x256xf32>
    %c11 = arith.constant 11 : index
    %c0_33 = arith.constant 0 : index
    %c0_34 = arith.constant 0 : index
    %108 = vector.load %arg2[%c11, %c0_33, %c0_34] : memref<15x1x256xf32, #tpu.memory_space<vmem>>, vector<1x1x256xf32>
    %109 = vector.shape_cast %108 : vector<1x1x256xf32> to vector<1x256xf32>
    %c11_35 = arith.constant 11 : index
    %110 = memref.load %arg1[%c11_35] : memref<30xf32, #tpu.memory_space<smem>>
    %111 = vector.broadcast %110 : f32 to vector<1x256xf32>
    %112 = arith.mulf %109, %111 : vector<1x256xf32>
    %113 = arith.addf %103, %112 : vector<1x256xf32>
    %c26 = arith.constant 26 : index
    %114 = memref.load %arg1[%c26] : memref<30xf32, #tpu.memory_space<smem>>
    %115 = vector.broadcast %114 : f32 to vector<1x256xf32>
    %116 = arith.mulf %109, %115 : vector<1x256xf32>
    %117 = arith.addf %107, %116 : vector<1x256xf32>
    %c12 = arith.constant 12 : index
    %c0_36 = arith.constant 0 : index
    %c0_37 = arith.constant 0 : index
    %118 = vector.load %arg2[%c12, %c0_36, %c0_37] : memref<15x1x256xf32, #tpu.memory_space<vmem>>, vector<1x1x256xf32>
    %119 = vector.shape_cast %118 : vector<1x1x256xf32> to vector<1x256xf32>
    %c12_38 = arith.constant 12 : index
    %120 = memref.load %arg1[%c12_38] : memref<30xf32, #tpu.memory_space<smem>>
    %121 = vector.broadcast %120 : f32 to vector<1x256xf32>
    %122 = arith.mulf %119, %121 : vector<1x256xf32>
    %123 = arith.addf %113, %122 : vector<1x256xf32>
    %c27 = arith.constant 27 : index
    %124 = memref.load %arg1[%c27] : memref<30xf32, #tpu.memory_space<smem>>
    %125 = vector.broadcast %124 : f32 to vector<1x256xf32>
    %126 = arith.mulf %119, %125 : vector<1x256xf32>
    %127 = arith.addf %117, %126 : vector<1x256xf32>
    %c13 = arith.constant 13 : index
    %c0_39 = arith.constant 0 : index
    %c0_40 = arith.constant 0 : index
    %128 = vector.load %arg2[%c13, %c0_39, %c0_40] : memref<15x1x256xf32, #tpu.memory_space<vmem>>, vector<1x1x256xf32>
    %129 = vector.shape_cast %128 : vector<1x1x256xf32> to vector<1x256xf32>
    %c13_41 = arith.constant 13 : index
    %130 = memref.load %arg1[%c13_41] : memref<30xf32, #tpu.memory_space<smem>>
    %131 = vector.broadcast %130 : f32 to vector<1x256xf32>
    %132 = arith.mulf %129, %131 : vector<1x256xf32>
    %133 = arith.addf %123, %132 : vector<1x256xf32>
    %c28 = arith.constant 28 : index
    %134 = memref.load %arg1[%c28] : memref<30xf32, #tpu.memory_space<smem>>
    %135 = vector.broadcast %134 : f32 to vector<1x256xf32>
    %136 = arith.mulf %129, %135 : vector<1x256xf32>
    %137 = arith.addf %127, %136 : vector<1x256xf32>
    %c14 = arith.constant 14 : index
    %c0_42 = arith.constant 0 : index
    %c0_43 = arith.constant 0 : index
    %138 = vector.load %arg2[%c14, %c0_42, %c0_43] : memref<15x1x256xf32, #tpu.memory_space<vmem>>, vector<1x1x256xf32>
    %139 = vector.shape_cast %138 : vector<1x1x256xf32> to vector<1x256xf32>
    %c14_44 = arith.constant 14 : index
    %140 = memref.load %arg1[%c14_44] : memref<30xf32, #tpu.memory_space<smem>>
    %141 = vector.broadcast %140 : f32 to vector<1x256xf32>
    %142 = arith.mulf %139, %141 : vector<1x256xf32>
    %143 = arith.addf %133, %142 : vector<1x256xf32>
    %c29 = arith.constant 29 : index
    %144 = memref.load %arg1[%c29] : memref<30xf32, #tpu.memory_space<smem>>
    %145 = vector.broadcast %144 : f32 to vector<1x256xf32>
    %146 = arith.mulf %139, %145 : vector<1x256xf32>
    %147 = arith.addf %137, %146 : vector<1x256xf32>
    %148 = math.cos %147 : vector<1x256xf32>
    %149 = arith.mulf %143, %148 : vector<1x256xf32>
    %c0_45 = arith.constant 0 : index
    %c0_46 = arith.constant 0 : index
    %150 = vector.load %arg3[%c0_45, %c0_46] : memref<1x256xf32, #tpu.memory_space<vmem>>, vector<1x256xf32>
    tpu.vector_store %arg3[%c0_45, %c0_46], %149 {strides = array<i32>} : memref<1x256xf32, #tpu.memory_space<vmem>>, vector<1x256xf32>,
    %151 = math.sin %147 : vector<1x256xf32>
    %152 = arith.mulf %143, %151 : vector<1x256xf32>
    %c0_47 = arith.constant 0 : index
    %c0_48 = arith.constant 0 : index
    %153 = vector.load %arg4[%c0_47, %c0_48] : memref<1x256xf32, #tpu.memory_space<vmem>>, vector<1x256xf32>
    tpu.vector_store %arg4[%c0_47, %c0_48], %152 {strides = array<i32>} : memref<1x256xf32, #tpu.memory_space<vmem>>, vector<1x256xf32>,
    return
  }
  func.func @transform_0(%arg0: i32) -> i32 {
    %c0_i32 = arith.constant 0 : i32
    %c0_i32_0 = arith.constant 0 : i32
    return %c0_i32 : i32
  }
  func.func @transform_1(%arg0: i32) -> (i32, i32, i32) {
    %c0_i32 = arith.constant 0 : i32
    %c0_i32_0 = arith.constant 0 : i32
    %c0_i32_1 = arith.constant 0 : i32
    return %c0_i32, %arg0, %c0_i32_0 : i32, i32, i32
  }
  func.func @transform_2(%arg0: i32) -> (i32, i32) {
    %c0_i32 = arith.constant 0 : i32
    %c0_i32_0 = arith.constant 0 : i32
    return %arg0, %c0_i32 : i32, i32
  }
  func.func @transform_3(%arg0: i32) -> (i32, i32) {
    %c0_i32 = arith.constant 0 : i32
    %c0_i32_0 = arith.constant 0 : i32
    return %arg0, %c0_i32 : i32, i32
  }
}

</mosaic_0001>

<llo_original>
// kernel: tpu_custom_call.1
$region0: #{tpu_custom_call.1}
  #allocation0 [shape = 'u32[]', space=smem, size = 0x4, offset = 0x4, fixed_abs, tag = 'smem constant byte address 0x4 - core index']
  #allocation1 [shape = 'u32[144,128]{1,0:T(1,128)}', space=vmem, size = 0x12000, scoped, tag = 'internal scratch']
  %s0 = inlined_call_operand.hbm [shape: f32[30], index: 0, kind: input, shape index: {}]
  %s1 = inlined_call_operand.hbm [shape: f32[15,1,256], index: 1, kind: input, shape index: {}]
  %s2 = inlined_call_operand.hbm [shape: f32[1,256], index: 2, kind: output, shape index: {0}]
  %s3 = inlined_call_operand.hbm [shape: f32[1,256], index: 3, kind: output, shape index: {1}]
  %4 = xla_tuple %s2, %s3
  %s5 = sld [smem:[#allocation0]]
  $region34: #{tpu_custom_call.1} parent=0
    _
  %s7 = ssub.s32 1, %s5
  %s8 = scalar_select 0, %s7, %s5
  $region1: #{tpu_custom_call.1} parent=0
    #allocation2 [shape = 'u8[512]{0}', space=smem, size = 0x200, scoped, tag = 'input window, operand 0, single buffered']
    #allocation3 [shape = 's32[1]{0}', space=sflag, size = 0x4, scoped, tag = 'scoped memory for tpu_custom_call.1']
    #allocation4 [shape = 's32[1]{0}', space=sflag, size = 0x4, scoped, tag = 'scoped memory for tpu_custom_call.1']
    #allocation5 [shape = 's32[1]{0}', space=sflag, size = 0x4, scoped, tag = 'scoped memory for tpu_custom_call.1']
    #allocation6 [shape = 'u8[15360]{0}', space=vmem, size = 0x3c00, scoped, tag = 'input window, operand 1, single buffered']
    #allocation7 [shape = 'u8[1024]{0}', space=vmem, size = 0x400, scoped, tag = 'output window, operand 0, single buffered']
    #allocation8 [shape = 'u8[1024]{0}', space=vmem, size = 0x400, scoped, tag = 'output window, operand 1, single buffered']
    #allocation9 [shape = 's32[1]{0}', space=sflag, size = 0x4, scoped, tag = 'scoped memory for tpu_custom_call.1']
    %9 = vsyncpa [#allocation5], 0
    %10 = vsyncpa [#allocation3], 0
    %11 = vsyncpa [#allocation4], 0
    %12 = vsyncpa [#allocation9], 0
    // Predicated region
    $region2: #{tpu_custom_call.1} parent=1 // pred_check
      _
    $region3: #{tpu_custom_call.1} parent=1 // pred_check_branch
      %14 = sbr.rel (0) target = $region5
    $region4: #{tpu_custom_call.1} parent=1 // pred_region
      %s16 = ssub.s32 16, 16
      %17 = vsyncadd [#allocation5], %s16
      %20 = dma.hbm_to_smem %s0, 16, [#allocation2], [#allocation5]
    $region5: #{tpu_custom_call.1} parent=1 // pred_fallthru
      _
    // Predicated region
    $region6: #{tpu_custom_call.1} parent=1 // pred_check
      _
    $region7: #{tpu_custom_call.1} parent=1 // pred_check_branch
      %22 = sbr.rel (0) target = $region9
    $region8: #{tpu_custom_call.1} parent=1 // pred_region
      %s24 = ssub.s32 480, 480
      %25 = vsyncadd [#allocation3], %s24
      %s26 = sshll.u32 [#allocation6], 4
      %s27 = int_to_ptr.vmem [resolvable:$true] %s26
      %32 = dma.hbm_to_vmem [thread:$0]  %s1, 480, %s27, [#allocation3], 32, 32, 2
    $region9: #{tpu_custom_call.1} parent=1 // pred_fallthru
      _
    // Predicated region
    $region10: #{tpu_custom_call.1} parent=1 // pred_check
      _
    $region11: #{tpu_custom_call.1} parent=1 // pred_check_branch
      %34 = sbr.rel (0) target = $region13
    $region12: #{tpu_custom_call.1} parent=1 // pred_region
      %35 = dma.done [#allocation5], 16
    $region13: #{tpu_custom_call.1} parent=1 // pred_fallthru
      _
    // Predicated region
    $region14: #{tpu_custom_call.1} parent=1 // pred_check
      _
    $region15: #{tpu_custom_call.1} parent=1 // pred_check_branch
      %37 = sbr.rel (0) target = $region17
    $region16: #{tpu_custom_call.1} parent=1 // pred_region
      %38 = dma.done [#allocation3], 480
    $region17: #{tpu_custom_call.1} parent=1 // pred_fallthru
      _
    %39 = sfence
    %v40 = vld [vmem:[#allocation6] sm:$0x3]
    %s41 = sld [smem:[#allocation2]]
    %v42 = vstv %s41
    %v43 = vmul.f32 %v40, %v42
    %s44 = sld [smem:[#allocation2 + $0xf]]
    %v45 = vstv %s44
    %v46 = vmul.f32 %v40, %v45
    %s47 = scalar_lea.vmem [#allocation6], 2
    %v48 = vld [vmem:[%s47] sm:$0x3]
    %s49 = sld [smem:[#allocation2 + $0x1]]
    %v50 = vstv %s49
    %v51 = vmul.f32 %v48, %v50
    %v52 = vadd.f32 %v43, %v51
    %s53 = sld [smem:[#allocation2 + $0x10]]
    %v54 = vstv %s53
    %v55 = vmul.f32 %v48, %v54
    %v56 = vadd.f32 %v46, %v55
    %s57 = scalar_lea.vmem [#allocation6], 4
    %v58 = vld [vmem:[%s57] sm:$0x3]
    %s59 = sld [smem:[#allocation2 + $0x2]]
    %v60 = vstv %s59
    %v61 = vmul.f32 %v58, %v60
    %v62 = vadd.f32 %v52, %v61
    %s63 = sld [smem:[#allocation2 + $0x11]]
    %v64 = vstv %s63
    %v65 = vmul.f32 %v58, %v64
    %v66 = vadd.f32 %v56, %v65
    %s67 = scalar_lea.vmem [#allocation6], 6
    %v68 = vld [vmem:[%s67] sm:$0x3]
    %s69 = sld [smem:[#allocation2 + $0x3]]
    %v70 = vstv %s69
    %v71 = vmul.f32 %v68, %v70
    %v72 = vadd.f32 %v62, %v71
    %s73 = sld [smem:[#allocation2 + $0x12]]
    %v74 = vstv %s73
    %v75 = vmul.f32 %v68, %v74
    %v76 = vadd.f32 %v66, %v75
    %s77 = scalar_lea.vmem [#allocation6], 8
    %v78 = vld [vmem:[%s77] sm:$0x3]
    %s79 = sld [smem:[#allocation2 + $0x4]]
    %v80 = vstv %s79
    %v81 = vmul.f32 %v78, %v80
    %v82 = vadd.f32 %v72, %v81
    %s83 = sld [smem:[#allocation2 + $0x13]]
    %v84 = vstv %s83
    %v85 = vmul.f32 %v78, %v84
    %v86 = vadd.f32 %v76, %v85
    %s87 = scalar_lea.vmem [#allocation6], 10
    %v88 = vld [vmem:[%s87] sm:$0x3]
    %s89 = sld [smem:[#allocation2 + $0x5]]
    %v90 = vstv %s89
    %v91 = vmul.f32 %v88, %v90
    %v92 = vadd.f32 %v82, %v91
    %s93 = sld [smem:[#allocation2 + $0x14]]
    %v94 = vstv %s93
    %v95 = vmul.f32 %v88, %v94
    %v96 = vadd.f32 %v86, %v95
    %s97 = scalar_lea.vmem [#allocation6], 12
    %v98 = vld [vmem:[%s97] sm:$0x3]
    %s99 = sld [smem:[#allocation2 + $0x6]]
    %v100 = vstv %s99
    %v101 = vmul.f32 %v98, %v100
    %v102 = vadd.f32 %v92, %v101
    %s103 = sld [smem:[#allocation2 + $0x15]]
    %v104 = vstv %s103
    %v105 = vmul.f32 %v98, %v104
    %v106 = vadd.f32 %v96, %v105
    %s107 = scalar_lea.vmem [#allocation6], 14
    %v108 = vld [vmem:[%s107] sm:$0x3]
    %s109 = sld [smem:[#allocation2 + $0x7]]
    %v110 = vstv %s109
    %v111 = vmul.f32 %v108, %v110
    %v112 = vadd.f32 %v102, %v111
    %s113 = sld [smem:[#allocation2 + $0x16]]
    %v114 = vstv %s113
    %v115 = vmul.f32 %v108, %v114
    %v116 = vadd.f32 %v106, %v115
    %s117 = scalar_lea.vmem [#allocation6], 16
    %v118 = vld [vmem:[%s117] sm:$0x3]
    %s119 = sld [smem:[#allocation2 + $0x8]]
    %v120 = vstv %s119
    %v121 = vmul.f32 %v118, %v120
    %v122 = vadd.f32 %v112, %v121
    %s123 = sld [smem:[#allocation2 + $0x17]]
    %v124 = vstv %s123
    %v125 = vmul.f32 %v118, %v124
    %v126 = vadd.f32 %v116, %v125
    %s127 = scalar_lea.vmem [#allocation6], 18
    %v128 = vld [vmem:[%s127] sm:$0x3]
    %s129 = sld [smem:[#allocation2 + $0x9]]
    %v130 = vstv %s129
    %v131 = vmul.f32 %v128, %v130
    %v132 = vadd.f32 %v122, %v131
    %s133 = sld [smem:[#allocation2 + $0x18]]
    %v134 = vstv %s133
    %v135 = vmul.f32 %v128, %v134
    %v136 = vadd.f32 %v126, %v135
    %s137 = scalar_lea.vmem [#allocation6], 20
    %v138 = vld [vmem:[%s137] sm:$0x3]
    %s139 = sld [smem:[#allocation2 + $0xa]]
    %v140 = vstv %s139
    %v141 = vmul.f32 %v138, %v140
    %v142 = vadd.f32 %v132, %v141
    %s143 = sld [smem:[#allocation2 + $0x19]]
    %v144 = vstv %s143
    %v145 = vmul.f32 %v138, %v144
    %v146 = vadd.f32 %v136, %v145
    %s147 = scalar_lea.vmem [#allocation6], 22
    %v148 = vld [vmem:[%s147] sm:$0x3]
    %s149 = sld [smem:[#allocation2 + $0xb]]
    %v150 = vstv %s149
    %v151 = vmul.f32 %v148, %v150
    %v152 = vadd.f32 %v142, %v151
    %s153 = sld [smem:[#allocation2 + $0x1a]]
    %v154 = vstv %s153
    %v155 = vmul.f32 %v148, %v154
    %v156 = vadd.f32 %v146, %v155
    %s157 = scalar_lea.vmem [#allocation6], 24
    %v158 = vld [vmem:[%s157] sm:$0x3]
    %s159 = sld [smem:[#allocation2 + $0xc]]
    %v160 = vstv %s159
    %v161 = vmul.f32 %v158, %v160
    %v162 = vadd.f32 %v152, %v161
    %s163 = sld [smem:[#allocation2 + $0x1b]]
    %v164 = vstv %s163
    %v165 = vmul.f32 %v158, %v164
    %v166 = vadd.f32 %v156, %v165
    %s167 = scalar_lea.vmem [#allocation6], 26
    %v168 = vld [vmem:[%s167] sm:$0x3]
    %s169 = sld [smem:[#allocation2 + $0xd]]
    %v170 = vstv %s169
    %v171 = vmul.f32 %v168, %v170
    %v172 = vadd.f32 %v162, %v171
    %s173 = sld [smem:[#allocation2 + $0x1c]]
    %v174 = vstv %s173
    %v175 = vmul.f32 %v168, %v174
    %v176 = vadd.f32 %v166, %v175
    %s177 = scalar_lea.vmem [#allocation6], 28
    %v178 = vld [vmem:[%s177] sm:$0x3]
    %s179 = sld [smem:[#allocation2 + $0xe]]
    %v180 = vstv %s179
    %v181 = vmul.f32 %v178, %v180
    %v182 = vadd.f32 %v172, %v181
    %s183 = sld [smem:[#allocation2 + $0x1d]]
    %v184 = vstv %s183
    %v185 = vmul.f32 %v178, %v184
    %v186 = vadd.f32 %v176, %v185
    %v187 = vand.u32 2147483647, %v186
    %vm188 = vcmp.le.f32.partialorder %v187, 0.7853982
    %vm189 = vcmp.lt.s32.totalorder %v186, 0
    %v190 = vand.u32 %v186, 2139095040
    %v191 = vshrl.u32 %v190, 23
    %v192 = vsub.s32 %v191, 127
    %v193 = vand.u32 2147483647, %v186
    %v194 = vand.u32 %v193, 8388607
    %v195 = vor.u32 %v194, 8388608
    %v196 = vsub.s32 0, %v195
    %v197 = vadd.s32 %v192, 1
    %vm198 = vcmp.gt.s32.totalorder %v197, 0
    %v199 = vsel %vm198, %v197, 0
    %v200 = vshrl.u32 %v199, 5
    %v201 = vand.u32 %v199, 31
    %v202 = vsub.s32 32, %v201
    %v203 = vshrl.u32 683565275, %v202
    %v204 = vshll.u32 683565275, %v201
    %v205 = vshrl.u32 2475754826, %v202
    %v206 = vor.u32 %v204, %v205
    %v207 = vshll.u32 2475754826, %v201
    %v208 = vshrl.u32 2131351028, %v202
    %v209 = vor.u32 %v207, %v208
    %v210 = vshll.u32 2131351028, %v201
    %v211 = vshrl.u32 2102212464, %v202
    %v212 = vor.u32 %v210, %v211
    %v213 = vshll.u32 2102212464, %v201
    %v214 = vshrl.u32 920167782, %v202
    %v215 = vor.u32 %v213, %v214
    %v216 = vshll.u32 920167782, %v201
    %v217 = vshrl.u32 1326507024, %v202
    %v218 = vor.u32 %v216, %v217
    %vm219 = vcmp.lt.s32.totalorder %v200, 1
    %vm220 = vcmp.lt.s32.totalorder %v200, 2
    %vm221 = vcmp.lt.s32.totalorder %v200, 3
    %vm222 = vcmp.lt.s32.totalorder %v200, 4
    %v223 = vsel %vm219, %v203, %v206
    %v224 = vsel %vm222, %v212, 2102212464
    %v225 = vsel %vm221, %v209, %v224
    %v226 = vsel %vm220, %v223, %v225
    %v227 = vsel %vm219, %v206, %v209
    %v228 = vsel %vm222, %v215, 920167782
    %v229 = vsel %vm221, %v212, %v228
    %v230 = vsel %vm220, %v227, %v229
    %v231 = vsel %vm219, %v209, %v212
    %v232 = vsel %vm222, %v218, 1326507024
    %v233 = vsel %vm221, %v215, %v232
    %v234 = vsel %vm220, %v231, %v233
    %v235 = vshll.u32 %v195, 8
    %v236 = vmul.u32.u64.compose %v235, %v234
    %v237 = vextract.low.u32 %v236
    %v238 = vextract.high.u32 %v236
    %v239 = vmul.u32.u64.compose %v235, %v230
    %v240 = vextract.low.u32 %v239
    %v241 = vextract.high.u32 %v239
    %v242 = vmul.u32 %v235, %v226
    %v243 = vadd.s32 %v238, %v240
    %vm244 = vc.u32 %v238, %v240
    %v245 = vadd.s32 %v241, 1
    %v246 = vsel %vm244, %v245, %v241
    %v247 = vadd.s32 %v242, %v246
    %v248 = vadd.s32 %v247, 536870912
    %v249 = vshrl.u32 %v248, 30
    %v250 = vshll.u32 %v249, 30
    %v251 = vsub.s32 %v247, %v250
    %vm252 = vcmp.lt.s32.totalorder %v251, 0
    %v253 = vsub.s32 0, %v251
    %v254 = vsel %vm252, %v253, %v251
    %v255 = vclz %v254
    %v256 = vsub.s32 %v255, 2
    %vm257 = vcmp.gt.s32.totalorder 0, %v256
    %v258 = vsel %vm257, 0, %v256
    %v259 = vsub.s32 32, %v258
    %v260 = vshll.u32 %v251, %v258
    %v261 = vshrl.u32 %v243, %v259
    %v262 = vor.u32 %v260, %v261
    %v263 = vsub.s32 4294967266, %v258
    %v264 = vadd.s32 %v263, 127
    %v265 = vshll.u32 %v264, 23
    %v266 = vor.u32 4788187, %v265
    %v267 = vand.u32 2147483647, %v266
    %v269 = vcvt.s32.f32 %v262
    %v270 = vmul.f32 %v269, %v267
    %v271 = vxor.u32 %v270, 2147483648
    %v272 = vsel %vm189, %v271, %v270
    %v273 = vsub.s32 4, %v249
    %v274 = vsel %vm189, %v273, %v249
    %v275 = vsel %vm188, %v186, %v272
    %v276 = vsel %vm188, 0, %v274
    %v277 = vcosq.f32.pop %v275
    %v278 = vsinq.f32.pop %v275
    %vm279 = vweird.f32 %v186
    %v280 = vand.u32 %v276, 3
    %vm281 = vcmp.lt.s32.totalorder %v280, 2
    %vm282 = vcmp.eq.s32.totalorder %v280, 0
    %v283 = vxor.u32 %v278, 2147483648
    %v284 = vsel %vm282, %v277, %v283
    %vm285 = vcmp.eq.s32.totalorder %v280, 2
    %v286 = vxor.u32 %v277, 2147483648
    %v287 = vsel %vm285, %v286, %v278
    %v288 = vsel %vm281, %v284, %v287
    %v289 = vsel %vm279, nan, %v288
    %v290 = vmul.f32 %v182, %v289
    %v291 = vlaneseq
    %vm292 = vcmp.ge.s32.totalorder %v291, 0
    %vm293 = vcmp.lt.s32.totalorder %v291, 256
    %vm294 = vmand %vm292, %vm293
    %295 = vst.msk [vmem:[#allocation7] sm:$0x3] %vm294, %v290
    %v296 = vand.u32 2147483647, %v186
    %vm297 = vcmp.le.f32.partialorder %v296, 0.7853982
    %vm298 = vcmp.lt.s32.totalorder %v186, 0
    %v299 = vand.u32 %v186, 2139095040
    %v300 = vshrl.u32 %v299, 23
    %v301 = vsub.s32 %v300, 127
    %v302 = vand.u32 2147483647, %v186
    %v303 = vand.u32 %v302, 8388607
    %v304 = vor.u32 %v303, 8388608
    %v305 = vsub.s32 0, %v304
    %v306 = vadd.s32 %v301, 1
    %vm307 = vcmp.gt.s32.totalorder %v306, 0
    %v308 = vsel %vm307, %v306, 0
    %v309 = vshrl.u32 %v308, 5
    %v310 = vand.u32 %v308, 31
    %v311 = vsub.s32 32, %v310
    %v312 = vshrl.u32 683565275, %v311
    %v313 = vshll.u32 683565275, %v310
    %v314 = vshrl.u32 2475754826, %v311
    %v315 = vor.u32 %v313, %v314
    %v316 = vshll.u32 2475754826, %v310
    %v317 = vshrl.u32 2131351028, %v311
    %v318 = vor.u32 %v316, %v317
    %v319 = vshll.u32 2131351028, %v310
    %v320 = vshrl.u32 2102212464, %v311
    %v321 = vor.u32 %v319, %v320
    %v322 = vshll.u32 2102212464, %v310
    %v323 = vshrl.u32 920167782, %v311
    %v324 = vor.u32 %v322, %v323
    %v325 = vshll.u32 920167782, %v310
    %v326 = vshrl.u32 1326507024, %v311
    %v327 = vor.u32 %v325, %v326
    %vm328 = vcmp.lt.s32.totalorder %v309, 1
    %vm329 = vcmp.lt.s32.totalorder %v309, 2
    %vm330 = vcmp.lt.s32.totalorder %v309, 3
    %vm331 = vcmp.lt.s32.totalorder %v309, 4
    %v332 = vsel %vm328, %v312, %v315
    %v333 = vsel %vm331, %v321, 2102212464
    %v334 = vsel %vm330, %v318, %v333
    %v335 = vsel %vm329, %v332, %v334
    %v336 = vsel %vm328, %v315, %v318
    %v337 = vsel %vm331, %v324, 920167782
    %v338 = vsel %vm330, %v321, %v337
    %v339 = vsel %vm329, %v336, %v338
    %v340 = vsel %vm328, %v318, %v321
    %v341 = vsel %vm331, %v327, 1326507024
    %v342 = vsel %vm330, %v324, %v341
    %v343 = vsel %vm329, %v340, %v342
    %v344 = vshll.u32 %v304, 8
    %v345 = vmul.u32.u64.compose %v344, %v343
    %v346 = vextract.low.u32 %v345
    %v347 = vextract.high.u32 %v345
    %v348 = vmul.u32.u64.compose %v344, %v339
    %v349 = vextract.low.u32 %v348
    %v350 = vextract.high.u32 %v348
    %v351 = vmul.u32 %v344, %v335
    %v352 = vadd.s32 %v347, %v349
    %vm353 = vc.u32 %v347, %v349
    %v354 = vadd.s32 %v350, 1
    %v355 = vsel %vm353, %v354, %v350
    %v356 = vadd.s32 %v351, %v355
    %v357 = vadd.s32 %v356, 536870912
    %v358 = vshrl.u32 %v357, 30
    %v359 = vshll.u32 %v358, 30
    %v360 = vsub.s32 %v356, %v359
    %vm361 = vcmp.lt.s32.totalorder %v360, 0
    %v362 = vsub.s32 0, %v360
    %v363 = vsel %vm361, %v362, %v360
    %v364 = vclz %v363
    %v365 = vsub.s32 %v364, 2
    %vm366 = vcmp.gt.s32.totalorder 0, %v365
    %v367 = vsel %vm366, 0, %v365
    %v368 = vsub.s32 32, %v367
    %v369 = vshll.u32 %v360, %v367
    %v370 = vshrl.u32 %v352, %v368
    %v371 = vor.u32 %v369, %v370
    %v372 = vsub.s32 4294967266, %v367
    %v373 = vadd.s32 %v372, 127
    %v374 = vshll.u32 %v373, 23
    %v375 = vor.u32 4788187, %v374
    %v376 = vand.u32 2147483647, %v375
    %v378 = vcvt.s32.f32 %v371
    %v379 = vmul.f32 %v378, %v376
    %v380 = vxor.u32 %v379, 2147483648
    %v381 = vsel %vm298, %v380, %v379
    %v382 = vsub.s32 4, %v358
    %v383 = vsel %vm298, %v382, %v358
    %v384 = vsel %vm297, %v186, %v381
    %v385 = vsel %vm297, 0, %v383
    %v386 = vcosq.f32.pop %v384
    %v387 = vsinq.f32.pop %v384
    %vm388 = vweird.f32 %v186
    %v389 = vadd.s32 %v385, 3
    %v390 = vand.u32 %v389, 3
    %vm391 = vcmp.lt.s32.totalorder %v390, 2
    %vm392 = vcmp.eq.s32.totalorder %v390, 0
    %v393 = vxor.u32 %v387, 2147483648
    %v394 = vsel %vm392, %v386, %v393
    %vm395 = vcmp.eq.s32.totalorder %v390, 2
    %v396 = vxor.u32 %v386, 2147483648
    %v397 = vsel %vm395, %v396, %v387
    %v398 = vsel %vm391, %v394, %v397
    %v399 = vsel %vm388, nan, %v398
    %v400 = vmul.f32 %v182, %v399
    %401 = vst.msk [vmem:[#allocation8] sm:$0x3] %vm294, %v400
    // Predicated region
    $region18: #{tpu_custom_call.1} parent=1 // pred_check
      _
    $region19: #{tpu_custom_call.1} parent=1 // pred_check_branch
      %403 = sbr.rel (0) target = $region21
    $region20: #{tpu_custom_call.1} parent=1 // pred_region
      %s405 = ssub.s32 32, 32
      %406 = vsyncadd [#allocation4], %s405
      %s408 = sshll.u32 [#allocation7], 4
      %s409 = int_to_ptr.vmem [resolvable:$true] %s408
      %411 = dma.vmem_to_hbm [thread:$0]  %s409, 32, %s2, [#allocation4]
    $region21: #{tpu_custom_call.1} parent=1 // pred_fallthru
      _
    // Predicated region
    $region22: #{tpu_custom_call.1} parent=1 // pred_check
      _
    $region23: #{tpu_custom_call.1} parent=1 // pred_check_branch
      %413 = sbr.rel (0) target = $region25
    $region24: #{tpu_custom_call.1} parent=1 // pred_region
      %s415 = ssub.s32 32, 32
      %416 = vsyncadd [#allocation9], %s415
      %s418 = sshll.u32 [#allocation8], 4
      %s419 = int_to_ptr.vmem [resolvable:$true] %s418
      %421 = dma.vmem_to_hbm [thread:$0]  %s419, 32, %s3, [#allocation9]
    $region25: #{tpu_custom_call.1} parent=1 // pred_fallthru
      _
    // Predicated region
    $region26: #{tpu_custom_call.1} parent=1 // pred_check
      _
    $region27: #{tpu_custom_call.1} parent=1 // pred_check_branch
      %423 = sbr.rel (0) target = $region29
    $region28: #{tpu_custom_call.1} parent=1 // pred_region
      %424 = dma.done [#allocation4], 32
    $region29: #{tpu_custom_call.1} parent=1 // pred_fallthru
      _
    // Predicated region
    $region30: #{tpu_custom_call.1} parent=1 // pred_check
      _
    $region31: #{tpu_custom_call.1} parent=1 // pred_check_branch
      %426 = sbr.rel (0) target = $region33
    $region32: #{tpu_custom_call.1} parent=1 // pred_region
      %427 = dma.done [#allocation9], 32
    $region33: #{tpu_custom_call.1} parent=1 // pred_fallthru
      _
    %428 = vsyncpa [#allocation3], 1
    %429 = vsyncpa [#allocation4], 1
    %430 = vsyncpa [#allocation9], 1
    %431 = vsyncpa [#allocation5], 1

</llo_original>
